<compile_context>
chip_gen: v5e
topology: v5e:2x2
jax: 0.10.0
libtpu: 0.0.40
codegen_flags: <defaults>
</compile_context>

<pallas_src>
import jax
import jax.numpy as jnp
from jax.experimental import pallas as pl
from jax.experimental.pallas import tpu as pltpu


def _make_pool_kernel(*, we, lanes, fold, op_dtype):
    """Fused 2x2 max-pool over lane-packed row pairs.

    The input block rows hold G groups of [image_row(2r) | image_row(2r+1)]
    (each `we` lanes wide) concatenated along lanes (`lanes = G * 2 * we`).
    `fold == False` means G == 1, so the two image rows are simply the two
    contiguous halves of each block row.
    """
    if fold:
        # Positive canonical shifts (== -we and -1 modulo `lanes`): after the
        # roll, lane j sees lane j+we / j+1.  pltpu.roll follows jnp.roll
        # semantics; no selected lane ever depends on a wrapped partner.
        shift_v = lanes - we
        shift_h = lanes - 1
    else:
        shift_h = we - 1  # == -1 modulo `we`

    def kernel(x_ref, sel_ref, o_ref):
        blk = x_ref[...]
        if fold:
            # Vertical (H) max: lane j vs lane j+we within each 2*we group.
            # XLU roll + VPU max (both units idle otherwise).
            v = jnp.maximum(blk, pltpu.roll(blk, shift=shift_v, axis=1))
        else:
            # G == 1: the two image rows are the contiguous halves of the row.
            v = jnp.maximum(blk[:, :we], blk[:, we:])
        # Horizontal (W) pairwise max: lane j vs lane j+1.  Only the even
        # lanes (inside each group's first half) are selected below.
        h = jnp.maximum(v, pltpu.roll(v, shift=shift_h, axis=1))
        # Lane compaction to a dense output: a single one-hot selection matmul
        # on the otherwise-idle MXU.  One-hot selection is exact: bf16
        # operands are already bf16 (f32 accumulation), and the f32 path is
        # checked against lax.reduce_window in __main__.
        out = jnp.dot(h.astype(op_dtype), sel_ref[...],
                      preferred_element_type=jnp.float32)
        o_ref[...] = out.astype(o_ref.dtype)

    return kernel


def unet_pool_crop(x, crop_size=None):
    """Forward of UNetPoolCropModule: returns (MaxPool2d(2, 2)(x), x)."""
    N, C, H, W = x.shape
    if H < 2 or W < 2:
        raise ValueError("MaxPool2d(2, 2) needs H >= 2 and W >= 2")
    H2, W2 = H // 2, W // 2
    We = 2 * W2
    itemsize = jnp.dtype(x.dtype).itemsize

    # MaxPool2d floor mode drops a trailing odd row / column.  NOTE: for odd
    # H/W this slice breaks contiguity and XLA materializes one extra copy for
    # the reshape below; the usual even-H/W U-Net case is copy-free.
    x_even = x if (H == 2 * H2 and W == We) else x[:, :, :2 * H2, :We]

    R = N * C * H2  # total number of pooled output rows

    # Lane-dense output: when W2 < 128, fold G consecutive output rows into
    # the lane dimension so stores are full-lane (unmasked) vst's.  G must
    # divide R so the input regrouping stays a free, contiguous reshape.
    G = 1
    if W2 < 128:
        G = min(pl.cdiv(128, W2), R)
        while G > 1 and R % G != 0:
            G -= 1
    Rv = R // G
    in_lanes = G * 2 * We            # lanes per packed input row
    out_lanes = G * W2               # lanes per output row
    Lc = We if G == 1 else in_lanes  # matmul contraction length

    # Free (contiguous) regrouping: no transpose, no data movement.
    x2 = x_even.reshape(Rv, in_lanes)

    # Matmul operand dtype: bf16 stays bf16 (native MXU rate, exact one-hot
    # selection with f32 accumulation); everything else runs as f32.
    op_dtype = jnp.bfloat16 if x.dtype == jnp.bfloat16 else jnp.float32

    # Hoisted one-hot selection matrix (built once, DMA'd once, VMEM-resident
    # via the constant index_map): column o selects lane (o//W2)*2*We + 2*(o%W2).
    k_idx = jnp.arange(Lc, dtype=jnp.int32)[:, None]
    o_idx = jnp.arange(out_lanes, dtype=jnp.int32)[None, :]
    sel = (k_idx == (o_idx // W2) * (2 * We) + 2 * (o_idx % W2)).astype(op_dtype)

    # Row-tile size: ~6 MiB input blocks amortize the ~0.35 us per-step
    # overhead; double-buffered in/out blocks plus kernel intermediates stay
    # well under the 48 MiB budget (v7x-safe).  Keep >= ~8 grid steps when
    # possible so the "parallel" axis can be split across v7x's two cores, and
    # align tm to the dtype's sublane packing.
    sub = {4: 8, 2: 16, 1: 32}.get(itemsize, 8)
    bytes_per_row = in_lanes * itemsize
    tm = max(sub, (6 * 1024 * 1024) // bytes_per_row)
    tm = min(tm, max(sub, pl.cdiv(Rv, 8)))
    if tm >= Rv:
        tm = Rv                              # full extent: always legal
    else:
        tm = max(sub, (tm // sub) * sub)     # sublane-aligned partial blocks
    grid = (pl.cdiv(Rv, tm),)

    kernel = _make_pool_kernel(we=We, lanes=in_lanes, fold=(G > 1),
                               op_dtype=op_dtype)

    pooled_flat = pl.pallas_call(
        kernel,
        out_shape=jax.ShapeDtypeStruct((Rv, out_lanes), x.dtype),
        grid=grid,
        in_specs=[
            pl.BlockSpec((tm, in_lanes), lambda i: (i, 0)),
            pl.BlockSpec((Lc, out_lanes), lambda i: (0, 0)),  # resident constant
        ],
        out_specs=pl.BlockSpec((tm, out_lanes), lambda i: (i, 0)),
        compiler_params=pltpu.CompilerParams(
            dimension_semantics=("parallel",),
            vmem_limit_bytes=48 * 1024 * 1024,
        ),
        cost_estimate=pl.CostEstimate(
            flops=2 * Rv * Lc * out_lanes + 3 * Rv * in_lanes,
            transcendentals=0,
            bytes_accessed=(Rv * in_lanes + Rv * out_lanes) * itemsize
                           + Lc * out_lanes * jnp.dtype(op_dtype).itemsize,
        ),
    )(x2, sel)

    pooled = pooled_flat.reshape(N, C, H2, W2)

    if crop_size:
        # TODO(synk): the PyTorch crop branch indexes with undefined Hdim/Wdim
        # globals and raises NameError, so there is no well-defined semantic
        # to port; only the default crop_size=None path is implemented.
        raise NotImplementedError(
            "crop_size path is undefined in the reference module (NameError on"
            " Hdim/Wdim); only crop_size=None is supported.")
    cropped = x
    return pooled, cropped


if __name__ == "__main__":
    key = jax.random.PRNGKey(0)

    def check(shape, dtype=jnp.float32):
        x = jax.random.normal(jax.random.fold_in(key, shape[-1]), shape, dtype)
        pooled, cropped = jax.jit(unet_pool_crop)(x)
        jax.block_until_ready((pooled, cropped))
        ref = jax.lax.reduce_window(
            x, -jnp.inf, jax.lax.max,
            window_dimensions=(1, 1, 2, 2),
            window_strides=(1, 1, 2, 2),
            padding="VALID")
        n, c, h, w = shape
        assert pooled.shape == (n, c, h // 2, w // 2), pooled.shape
        err = float(jnp.max(jnp.abs(pooled.astype(jnp.float32)
                                    - ref.astype(jnp.float32))))
        assert err <= 1e-5, f"maxpool mismatch for {shape}: max abs err = {err:e}"
        assert cropped.shape == x.shape and bool(jnp.array_equal(cropped, x))

    # Small NCHW shape matching the module's forward (W2 < 128 -> exercises
    # the lane-folded, roll-based path).
    check((2, 4, 16, 16))
    # Wider spatial dim (W2 >= 128 -> exercises the G == 1 half-contraction
    # path and a multi-step "parallel" grid).
    check((1, 2, 16, 256))

    print("KERNEL_OK")
</pallas_src>

<mosaic_0001>
module attributes {stable_mosaic.version = 11 : i64} {
  func.func @kernel(%arg0: i32, %arg1: memref<4x512xf32, #tpu.memory_space<vmem>>, %arg2: memref<512x128xf32, #tpu.memory_space<vmem>>, %arg3: memref<4x128xf32, #tpu.memory_space<vmem>>) attributes {dimension_semantics = [#tpu.dimension_semantics<parallel>], iteration_bounds = array<i64: 1>, scalar_prefetch = 0 : i64, scratch_operands = 0 : i64, tpu.core_type = #tpu.core_type<tc>, window_params = [{transform_indices = @transform_0, window_bounds = array<i64: 4, 512>}, {pipeline_mode = #tpu.pipeline_mode<synchronous>, transform_indices = @transform_1, window_bounds = array<i64: 512, 128>}, {transform_indices = @transform_2, window_bounds = array<i64: 4, 128>}]} {
    %c0 = arith.constant 0 : index
    %c0_0 = arith.constant 0 : index
    %0 = vector.load %arg1[%c0, %c0_0] : memref<4x512xf32, #tpu.memory_space<vmem>>, vector<4x512xf32>
    %c496_i32 = arith.constant 496 : i32
    %1 = tpu.dynamic_rotate %0 by %c496_i32 dim 1 : vector<4x512xf32>, i32 -> vector<4x512xf32>
    %2 = arith.maximumf %0, %1 : vector<4x512xf32>
    %c511_i32 = arith.constant 511 : i32
    %3 = tpu.dynamic_rotate %2 by %c511_i32 dim 1 : vector<4x512xf32>, i32 -> vector<4x512xf32>
    %4 = arith.maximumf %2, %3 : vector<4x512xf32>
    %c0_1 = arith.constant 0 : index
    %c0_2 = arith.constant 0 : index
    %5 = vector.load %arg2[%c0_1, %c0_2] : memref<512x128xf32, #tpu.memory_space<vmem>>, vector<512x128xf32>
    %cst = arith.constant dense<0.000000e+00> : vector<4x128xf32>
    %6 = tpu.matmul %4, %5, %cst {dimension_numbers = #tpu.dot_dimension_numbers<[1], [0], [0], [1], [0, 0, 1, 1], [], []>} : vector<4x512xf32>, vector<512x128xf32>, vector<4x128xf32> -> vector<4x128xf32>
    %c0_3 = arith.constant 0 : index
    %c0_4 = arith.constant 0 : index
    %7 = vector.load %arg3[%c0_3, %c0_4] : memref<4x128xf32, #tpu.memory_space<vmem>>, vector<4x128xf32>
    tpu.vector_store %arg3[%c0_3, %c0_4], %6 {strides = array<i32>} : memref<4x128xf32, #tpu.memory_space<vmem>>, vector<4x128xf32>,
    return
  }
  func.func @transform_0(%arg0: i32) -> (i32, i32) {
    %c0_i32 = arith.constant 0 : i32
    %c0_i32_0 = arith.constant 0 : i32
    return %arg0, %c0_i32 : i32, i32
  }
  func.func @transform_1(%arg0: i32) -> (i32, i32) {
    %c0_i32 = arith.constant 0 : i32
    %c0_i32_0 = arith.constant 0 : i32
    %c0_i32_1 = arith.constant 0 : i32
    return %c0_i32, %c0_i32_0 : i32, i32
  }
  func.func @transform_2(%arg0: i32) -> (i32, i32) {
    %c0_i32 = arith.constant 0 : i32
    %c0_i32_0 = arith.constant 0 : i32
    return %arg0, %c0_i32 : i32, i32
  }
}

</mosaic_0001>

<llo_original>
// kernel: unet_pool_crop.1
$region0: #{unet_pool_crop.1}
  #allocation0 [shape = 'u32[]', space=smem, size = 0x4, offset = 0x4, fixed_abs, tag = 'smem constant byte address 0x4 - core index']
  #allocation1 [shape = 'u32[72,128]{1,0:T(1,128)}', space=vmem, size = 0x9000, scoped, tag = 'internal scratch']
  %s0 = inlined_call_operand.vmem [shape: f32[4,512], index: 0, kind: input, shape index: {}]
  %s1 = inlined_call_operand.vmem [shape: f32[512,128], index: 1, kind: input, shape index: {}]
  %s2 = inlined_call_operand.vmem [shape: f32[4,128], index: 2, kind: output, shape index: {}]
  %s3 = sld [smem:[#allocation0]]
  $region18: #{unet_pool_crop.1} parent=0
    _
  %s5 = ssub.s32 1, %s3
  %s6 = scalar_select 0, %s5, %s3
  // Predicated region
  $region2: #{unet_pool_crop.1} parent=0 // pred_check
    _
  $region3: #{unet_pool_crop.1} parent=0 // pred_check_branch
    %8 = sbr.rel (0) target = $region5
  $region4: #{unet_pool_crop.1} parent=0 // pred_region
    _
  $region5: #{unet_pool_crop.1} parent=0 // pred_fallthru
    _
  // Predicated region
  $region6: #{unet_pool_crop.1} parent=0 // pred_check
    _
  $region7: #{unet_pool_crop.1} parent=0 // pred_check_branch
    %10 = sbr.rel (0) target = $region9
  $region8: #{unet_pool_crop.1} parent=0 // pred_region
    _
  $region9: #{unet_pool_crop.1} parent=0 // pred_fallthru
    _
  %v11 = vld [vmem:[%s0] sm:$0xff]
  %v12 = vld [vmem:[%s0 + $0x8] sm:$0xff]
  %15 = vst [vmem:[#allocation1] ss:$2 sm:$0xff] %v11
  %s16 = scalar_lea.vmem [#allocation1], 16
  %17 = vst [vmem:[%s16] ss:$2 sm:$0xff] %v12
  %v18 = vld.sshfl [vmem:[#allocation1] sm:$0xff pattern:$0x75316420]
  %v19 = vld.sshfl [vmem:[#allocation1 + $0x8] sm:$0xff pattern:$0x75316420]
  %v20 = vld.sshfl [vmem:[#allocation1 + $0x10] sm:$0xff pattern:$0x75316420]
  %v21 = vld.sshfl [vmem:[#allocation1 + $0x18] sm:$0xff pattern:$0x75316420]
  %26 = vrot.lane.b32.xlu0 %v18, 112
  %v27 = vpop.permute.xlu0 %26
  %28 = vrot.lane.b32.xlu0 %v19, 112
  %v29 = vpop.permute.xlu0 %28
  %30 = vrot.lane.b32.xlu0 %v20, 112
  %v31 = vpop.permute.xlu0 %30
  %32 = vrot.lane.b32.xlu0 %v21, 112
  %v33 = vpop.permute.xlu0 %32
  %v34 = vlaneseq
  %v35 = vand.u32 %v34, 127
  %vm36 = vcmp.lt.s32.totalorder %v35, 112
  %v37 = vsel %vm36, %v31, %v33
  %v38 = vsel %vm36, %v29, %v31
  %v39 = vsel %vm36, %v27, %v29
  %v40 = vsel %vm36, %v33, %v27
  %v45 = vrot.slane %v38, 4
  %v46 = vrot.slane %v40, 4
  %vm47 = vcmask 1043456
  %v48 = vsel %vm47, %v39, %v45
  %v49 = vsel %vm47, %v37, %v46
  %v52 = vmax.f32 %v11, %v48
  %v53 = vmax.f32 %v12, %v49
  %56 = vst [vmem:[#allocation1] ss:$2 sm:$0xff] %v52
  %s57 = scalar_lea.vmem [#allocation1], 16
  %58 = vst [vmem:[%s57] ss:$2 sm:$0xff] %v53
  %v59 = vld.sshfl [vmem:[#allocation1] sm:$0xff pattern:$0x75316420]
  %v60 = vld.sshfl [vmem:[#allocation1 + $0x8] sm:$0xff pattern:$0x75316420]
  %v61 = vld.sshfl [vmem:[#allocation1 + $0x10] sm:$0xff pattern:$0x75316420]
  %v62 = vld.sshfl [vmem:[#allocation1 + $0x18] sm:$0xff pattern:$0x75316420]
  %67 = vrot.lane.b32.xlu0 %v59, 127
  %v68 = vpop.permute.xlu0 %67
  %69 = vrot.lane.b32.xlu0 %v60, 127
  %v70 = vpop.permute.xlu0 %69
  %71 = vrot.lane.b32.xlu0 %v61, 127
  %v72 = vpop.permute.xlu0 %71
  %73 = vrot.lane.b32.xlu0 %v62, 127
  %v74 = vpop.permute.xlu0 %73
  %vm75 = vcmp.lt.s32.totalorder %v35, 127
  %v76 = vsel %vm75, %v72, %v74
  %v77 = vsel %vm75, %v70, %v72
  %v78 = vsel %vm75, %v68, %v70
  %v79 = vsel %vm75, %v74, %v68
  %v84 = vrot.slane %v77, 4
  %v85 = vrot.slane %v79, 4
  %v86 = vsel %vm47, %v78, %v84
  %v87 = vsel %vm47, %v76, %v85
  %v90 = vmax.f32 %v52, %v86
  %v91 = vmax.f32 %v53, %v87
  %v92 = vld [vmem:[%s1] sm:$0xff]
  %v93 = vld [vmem:[%s1 + $0x8] sm:$0xff]
  %v94 = vld [vmem:[%s1 + $0x10] sm:$0xff]
  %v95 = vld [vmem:[%s1 + $0x18] sm:$0xff]
  %v96 = vld [vmem:[%s1 + $0x20] sm:$0xff]
  %v97 = vld [vmem:[%s1 + $0x28] sm:$0xff]
  %v98 = vld [vmem:[%s1 + $0x30] sm:$0xff]
  %v99 = vld [vmem:[%s1 + $0x38] sm:$0xff]
  %v100 = vld [vmem:[%s1 + $0x40] sm:$0xff]
  %v101 = vld [vmem:[%s1 + $0x48] sm:$0xff]
  %v102 = vld [vmem:[%s1 + $0x50] sm:$0xff]
  %v103 = vld [vmem:[%s1 + $0x58] sm:$0xff]
  %v104 = vld [vmem:[%s1 + $0x60] sm:$0xff]
  %v105 = vld [vmem:[%s1 + $0x68] sm:$0xff]
  %v106 = vld [vmem:[%s1 + $0x70] sm:$0xff]
  %v107 = vld [vmem:[%s1 + $0x78] sm:$0xff]
  %v108 = vld [vmem:[%s1 + $0x80] sm:$0xff]
  %v109 = vld [vmem:[%s1 + $0x88] sm:$0xff]
  %v110 = vld [vmem:[%s1 + $0x90] sm:$0xff]
  %v111 = vld [vmem:[%s1 + $0x98] sm:$0xff]
  %v112 = vld [vmem:[%s1 + $0xa0] sm:$0xff]
  %v113 = vld [vmem:[%s1 + $0xa8] sm:$0xff]
  %v114 = vld [vmem:[%s1 + $0xb0] sm:$0xff]
  %v115 = vld [vmem:[%s1 + $0xb8] sm:$0xff]
  %v116 = vld [vmem:[%s1 + $0xc0] sm:$0xff]
  %v117 = vld [vmem:[%s1 + $0xc8] sm:$0xff]
  %v118 = vld [vmem:[%s1 + $0xd0] sm:$0xff]
  %v119 = vld [vmem:[%s1 + $0xd8] sm:$0xff]
  %v120 = vld [vmem:[%s1 + $0xe0] sm:$0xff]
  %v121 = vld [vmem:[%s1 + $0xe8] sm:$0xff]
  %v122 = vld [vmem:[%s1 + $0xf0] sm:$0xff]
  %v123 = vld [vmem:[%s1 + $0xf8] sm:$0xff]
  %v124 = vld [vmem:[%s1 + $0x100] sm:$0xff]
  %v125 = vld [vmem:[%s1 + $0x108] sm:$0xff]
  %v126 = vld [vmem:[%s1 + $0x110] sm:$0xff]
  %v127 = vld [vmem:[%s1 + $0x118] sm:$0xff]
  %v128 = vld [vmem:[%s1 + $0x120] sm:$0xff]
  %v129 = vld [vmem:[%s1 + $0x128] sm:$0xff]
  %v130 = vld [vmem:[%s1 + $0x130] sm:$0xff]
  %v131 = vld [vmem:[%s1 + $0x138] sm:$0xff]
  %v132 = vld [vmem:[%s1 + $0x140] sm:$0xff]
  %v133 = vld [vmem:[%s1 + $0x148] sm:$0xff]
  %v134 = vld [vmem:[%s1 + $0x150] sm:$0xff]
  %v135 = vld [vmem:[%s1 + $0x158] sm:$0xff]
  %v136 = vld [vmem:[%s1 + $0x160] sm:$0xff]
  %v137 = vld [vmem:[%s1 + $0x168] sm:$0xff]
  %v138 = vld [vmem:[%s1 + $0x170] sm:$0xff]
  %v139 = vld [vmem:[%s1 + $0x178] sm:$0xff]
  %v140 = vld [vmem:[%s1 + $0x180] sm:$0xff]
  %v141 = vld [vmem:[%s1 + $0x188] sm:$0xff]
  %v142 = vld [vmem:[%s1 + $0x190] sm:$0xff]
  %v143 = vld [vmem:[%s1 + $0x198] sm:$0xff]
  %v144 = vld [vmem:[%s1 + $0x1a0] sm:$0xff]
  %v145 = vld [vmem:[%s1 + $0x1a8] sm:$0xff]
  %v146 = vld [vmem:[%s1 + $0x1b0] sm:$0xff]
  %v147 = vld [vmem:[%s1 + $0x1b8] sm:$0xff]
  %v148 = vld [vmem:[%s1 + $0x1c0] sm:$0xff]
  %v149 = vld [vmem:[%s1 + $0x1c8] sm:$0xff]
  %v150 = vld [vmem:[%s1 + $0x1d0] sm:$0xff]
  %v151 = vld [vmem:[%s1 + $0x1d8] sm:$0xff]
  %v152 = vld [vmem:[%s1 + $0x1e0] sm:$0xff]
  %v153 = vld [vmem:[%s1 + $0x1e8] sm:$0xff]
  %v154 = vld [vmem:[%s1 + $0x1f0] sm:$0xff]
  %v155 = vld [vmem:[%s1 + $0x1f8] sm:$0xff]
  %158 = vst [vmem:[#allocation1] ss:$2 sm:$0xff] %v90
  %s159 = scalar_lea.vmem [#allocation1], 16
  %160 = vst [vmem:[%s159] ss:$2 sm:$0xff] %v91
  %v161 = vld.sshfl [vmem:[#allocation1] sm:$0xff pattern:$0x75316420]
  %v162 = vld.sshfl [vmem:[#allocation1 + $0x8] sm:$0xff pattern:$0x75316420]
  %v163 = vld.sshfl [vmem:[#allocation1 + $0x10] sm:$0xff pattern:$0x75316420]
  %v164 = vld.sshfl [vmem:[#allocation1 + $0x18] sm:$0xff pattern:$0x75316420]
  %169 = vmatpush.msra.mxu0 %v107
  %170 = vmatpush.msra.mxu0 %v106
  %171 = vmatpush.msra.mxu0 %v105
  %172 = vmatpush.msra.mxu0 %v104
  %173 = vmatpush.msra.mxu0 %v103
  %174 = vmatpush.msra.mxu0 %v102
  %175 = vmatpush.msra.mxu0 %v101
  %176 = vmatpush.msra.mxu0 %v100
  %177 = vmatpush.msra.mxu0 %v99
  %178 = vmatpush.msra.mxu0 %v98
  %179 = vmatpush.msra.mxu0 %v97
  %180 = vmatpush.msra.mxu0 %v96
  %181 = vmatpush.msra.mxu0 %v95
  %182 = vmatpush.msra.mxu0 %v94
  %183 = vmatpush.msra.mxu0 %v93
  %184 = vmatpush.msra.mxu0 %v92
  %185 = vmatmul.f32.gmra.mxu0 %v161
  %v186 = vpop.f32.mrf.mxu0
  %v187 = vadd.f32 0.0, %v186
  %188 = vdwg.mxu0
  %189 = vmatpush.msra.mxu0 %v123
  %190 = vmatpush.msra.mxu0 %v122
  %191 = vmatpush.msra.mxu0 %v121
  %192 = vmatpush.msra.mxu0 %v120
  %193 = vmatpush.msra.mxu0 %v119
  %194 = vmatpush.msra.mxu0 %v118
  %195 = vmatpush.msra.mxu0 %v117
  %196 = vmatpush.msra.mxu0 %v116
  %197 = vmatpush.msra.mxu0 %v115
  %198 = vmatpush.msra.mxu0 %v114
  %199 = vmatpush.msra.mxu0 %v113
  %200 = vmatpush.msra.mxu0 %v112
  %201 = vmatpush.msra.mxu0 %v111
  %202 = vmatpush.msra.mxu0 %v110
  %203 = vmatpush.msra.mxu0 %v109
  %204 = vmatpush.msra.mxu0 %v108
  %205 = vmatmul.f32.gmra.mxu0 %v162
  %v206 = vpop.f32.mrf.mxu0
  %v207 = vadd.f32 %v187, %v206
  %208 = vdwg.mxu0
  %209 = vmatpush.msra.mxu0 %v139
  %210 = vmatpush.msra.mxu0 %v138
  %211 = vmatpush.msra.mxu0 %v137
  %212 = vmatpush.msra.mxu0 %v136
  %213 = vmatpush.msra.mxu0 %v135
  %214 = vmatpush.msra.mxu0 %v134
  %215 = vmatpush.msra.mxu0 %v133
  %216 = vmatpush.msra.mxu0 %v132
  %217 = vmatpush.msra.mxu0 %v131
  %218 = vmatpush.msra.mxu0 %v130
  %219 = vmatpush.msra.mxu0 %v129
  %220 = vmatpush.msra.mxu0 %v128
  %221 = vmatpush.msra.mxu0 %v127
  %222 = vmatpush.msra.mxu0 %v126
  %223 = vmatpush.msra.mxu0 %v125
  %224 = vmatpush.msra.mxu0 %v124
  %225 = vmatmul.f32.gmra.mxu0 %v163
  %v226 = vpop.f32.mrf.mxu0
  %v227 = vadd.f32 %v207, %v226
  %228 = vdwg.mxu0
  %229 = vmatpush.msra.mxu0 %v155
  %230 = vmatpush.msra.mxu0 %v154
  %231 = vmatpush.msra.mxu0 %v153
  %232 = vmatpush.msra.mxu0 %v152
  %233 = vmatpush.msra.mxu0 %v151
  %234 = vmatpush.msra.mxu0 %v150
  %235 = vmatpush.msra.mxu0 %v149
  %236 = vmatpush.msra.mxu0 %v148
  %237 = vmatpush.msra.mxu0 %v147
  %238 = vmatpush.msra.mxu0 %v146
  %239 = vmatpush.msra.mxu0 %v145
  %240 = vmatpush.msra.mxu0 %v144
  %241 = vmatpush.msra.mxu0 %v143
  %242 = vmatpush.msra.mxu0 %v142
  %243 = vmatpush.msra.mxu0 %v141
  %244 = vmatpush.msra.mxu0 %v140
  %245 = vmatmul.f32.gmra.mxu0 %v164
  %v246 = vpop.f32.mrf.mxu0
  %v247 = vadd.f32 %v227, %v246
  %248 = vdwg.mxu0
  %249 = vst [vmem:[%s2] sm:$0xf] %v247
  // Predicated region
  $region10: #{unet_pool_crop.1} parent=0 // pred_check
    _
  $region11: #{unet_pool_crop.1} parent=0 // pred_check_branch
    %251 = sbr.rel (0) target = $region13
  $region12: #{unet_pool_crop.1} parent=0 // pred_region
    _
  $region13: #{unet_pool_crop.1} parent=0 // pred_fallthru
    _
  // Predicated region
  $region14: #{unet_pool_crop.1} parent=0 // pred_check
    _
  $region15: #{unet_pool_crop.1} parent=0 // pred_check_branch
    %253 = sbr.rel (0) target = $region17
  $region16: #{unet_pool_crop.1} parent=0 // pred_region
    _
  $region17: #{unet_pool_crop.1} parent=0 // pred_fallthru
    _

</llo_original>
